<compile_context>
chip_gen: v5e
topology: v5e:2x2
jax: 0.10.0
libtpu: 0.0.40
codegen_flags: <defaults>
</compile_context>

<pallas_src>
import functools
import random

import jax
import jax.numpy as jnp
import numpy as np
from jax import lax
from jax.experimental import pallas as pl
from jax.experimental.pallas import tpu as pltpu

_LANES = 128
_SUBLANES = 8
_MAX_TILE_ROWS = 4096      # cap on block rows (amortizes ~0.35us grid-step overhead)
_MAX_CHUNK_ROWS = 64       # cap on in-kernel row chunk
_SORT_MIN_E = 8            # use sorted-ensemble identity for term2 when E >= this


# ---------------------------------------------------------------------------
# Compile-time helpers
# ---------------------------------------------------------------------------
def _batcher_pairs(n):
    """Batcher odd-even mergesort compare-exchange pairs for arbitrary n."""
    pairs = []
    p = 1
    while p < n:
        k = p
        while k >= 1:
            j = k % p
            while j + k < n:
                for i in range(min(k, n - j - k)):
                    if (i + j) // (2 * p) == (i + j + k) // (2 * p):
                        pairs.append((i + j, i + j + k))
                j += 2 * k
            k //= 2
        p *= 2
    return pairs


def _network_sorts(n, pairs):
    """Compile-time sanity check that the comparator network actually sorts."""
    rng = random.Random(0)
    tests = [list(range(n - 1, -1, -1))]
    tests += [[rng.randrange(10 * n + 7) for _ in range(n)] for _ in range(4)]
    for v in tests:
        w = list(v)
        for i, j in pairs:
            if w[i] > w[j]:
                w[i], w[j] = w[j], w[i]
        if w != sorted(v):
            return False
    return True


def _term2_sort_pairs(E):
    """Comparator network for the sorted-ensemble identity, or None -> pair loop."""
    if E < _SORT_MIN_E:
        return None
    pairs = _batcher_pairs(E)
    return pairs if _network_sorts(E, pairs) else None


def _tree_sum(parts):
    parts = list(parts)
    while len(parts) > 1:
        nxt = [parts[i] + parts[i + 1] for i in range(0, len(parts) - 1, 2)]
        if len(parts) % 2:
            nxt.append(parts[-1])
        parts = nxt
    return parts[0]


def _vmem_capacity_bytes():
    try:
        return int(pltpu.get_tpu_info().vmem_capacity_bytes)
    except Exception:
        return 64 * 1024 * 1024   # conservative (v7x-sized) fallback


def _pick_chunk_rows(E):
    # Keep the per-chunk live set (E member slices + obs + a few partials) within
    # ~48 of the 64-entry vreg file: (E + 5) * chunk/8 <= ~48.
    groups = max(1, 48 // (E + 5))
    return int(min(_MAX_CHUNK_ROWS, groups * _SUBLANES))


def _round_up(x, m):
    return -(-x // m) * m


# ---------------------------------------------------------------------------
# Kernel
# ---------------------------------------------------------------------------
def _make_crps_kernel(E, tile_r, chunk, inv_be, neg_inv_bee, sort_pairs):
    n_full = tile_r // chunk
    rem = tile_r - n_full * chunk

    def emit_chunk(fore_ref, obs_ref, out_ref, r, rows, is_first):
        obs = obs_ref[0, pl.ds(r, rows), :]
        # Each ensemble member chunk is loaded exactly once, reused by both terms.
        f = [fore_ref[e, pl.ds(r, rows), :] for e in range(E)]

        # term1 partial sum: sum_e |f_e - obs|  (independent partials -> tree sum).
        np1 = min(4, E)
        p1 = [jnp.abs(f[e] - obs) for e in range(np1)]
        for e in range(np1, E):
            p1[e % np1] = p1[e % np1] + jnp.abs(f[e] - obs)
        acc1 = _tree_sum(p1)

        if E >= 2:
            if sort_pairs is not None:
                # Sorted-ensemble identity (per-lane sort; O(E log^2 E) min/max):
                #   sum_{i<j} |x_i - x_j| = sum_k (2k - E + 1) * sort(x)_k
                x = list(f)
                for i, j in sort_pairs:
                    lo = jnp.minimum(x[i], x[j])
                    hi = jnp.maximum(x[i], x[j])
                    x[i] = lo
                    x[j] = hi
                p2 = [x[k] * float(2 * k - E + 1)
                      for k in range(E) if (2 * k - E + 1) != 0]
                acc2 = _tree_sum(p2)
            else:
                # Pair symmetry: unordered pairs only (diagonal = 0; the x2 and
                # 1/E^2 are folded into neg_inv_bee).
                pairs = [(i, j) for i in range(E) for j in range(i + 1, E)]
                np2 = min(4, len(pairs))
                p2 = [jnp.abs(f[i] - f[j]) for i, j in pairs[:np2]]
                for idx, (i, j) in enumerate(pairs[np2:]):
                    p2[idx % np2] = p2[idx % np2] + jnp.abs(f[i] - f[j])
                acc2 = _tree_sum(p2)
            contrib = inv_be * acc1 + neg_inv_bee * acc2
        else:
            contrib = inv_be * acc1

        # Fold the batch==0 init into the first accumulate (store vs load+add).
        @pl.when(is_first)
        def _():
            out_ref[pl.ds(r, rows), :] = contrib

        @pl.when(jnp.logical_not(is_first))
        def _():
            out_ref[pl.ds(r, rows), :] = out_ref[pl.ds(r, rows), :] + contrib

    def kernel(fore_ref, obs_ref, out_ref):
        # fore_ref: (E, tile_r, 128), obs_ref: (1, tile_r, 128), out_ref: (tile_r, 128)
        is_first = pl.program_id(1) == 0

        if n_full == 1 and rem == 0:
            emit_chunk(fore_ref, obs_ref, out_ref, 0, chunk, is_first)
        else:
            def body(c, carry):
                r = pl.multiple_of(c * chunk, chunk)
                emit_chunk(fore_ref, obs_ref, out_ref, r, chunk, is_first)
                return carry

            lax.fori_loop(0, n_full, body, 0)
            if rem > 0:
                emit_chunk(fore_ref, obs_ref, out_ref, n_full * chunk, rem, is_first)

    return kernel


# ---------------------------------------------------------------------------
# Wrapper
# ---------------------------------------------------------------------------
@jax.jit
def crps_loss_batch_add_first(fore, obs):
    """fore: (B, E, W, H), obs: (B, 1, W, H)  ->  (W, H) float32."""
    B, E, W, H = fore.shape
    assert obs.shape == (B, 1, W, H)

    fore = fore.astype(jnp.float32)
    obs = obs.astype(jnp.float32)

    # Lane-dense layout: flatten (W, H) -> S and view as (r0, 128) rows.  Pad S only
    # up to the next multiple of 128 when the reshape strictly requires it; tile
    # remainders are handled with a ragged trailing grid block (no over-padding).
    S = W * H
    r0 = -(-S // _LANES)
    s_pad = r0 * _LANES

    fore_f = fore.reshape(B, E, S)
    obs_f = obs.reshape(B, 1, S)
    if s_pad != S:
        fore_f = jnp.pad(fore_f, ((0, 0), (0, 0), (0, s_pad - S)))
        obs_f = jnp.pad(obs_f, ((0, 0), (0, 0), (0, s_pad - S)))
    fore_f = fore_f.reshape(B, E, r0, _LANES)
    obs_f = obs_f.reshape(B, 1, r0, _LANES)

    # Generation-aware VMEM budget: double-buffered blocks at ~1/4 of physical VMEM,
    # scoped limit at ~1/2, leaving headroom for Mosaic internal scratch.
    vmem_cap = _vmem_capacity_bytes()
    block_budget = vmem_cap // 4
    bytes_per_row = (2 * E + 2 + 2) * _LANES * 4   # fore(x2 bufs) + obs(x2) + out(x2)
    max_rows = max(_SUBLANES, block_budget // bytes_per_row)

    chunk = _pick_chunk_rows(E)
    tile_r = min(r0, _MAX_TILE_ROWS, max_rows)

    if tile_r >= r0 and r0 >= 2 * _SUBLANES:
        # Whole extent would fit in one block: split into >= 2 spatial tiles so the
        # "parallel" axis can be sharded across v7x's two TensorCores (harmless one
        # extra grid step on single-TC v5e/v6e).
        tile_r = _round_up((r0 + 1) // 2, _SUBLANES)

    if tile_r < r0:
        # Multi-tile: block rows must be a multiple of 8 and of the chunk size.
        tile_r = max(_SUBLANES, (tile_r // _SUBLANES) * _SUBLANES)
        chunk = min(chunk, tile_r)
        tile_r = (tile_r // chunk) * chunk
    else:
        tile_r = r0
        chunk = min(chunk, tile_r)

    grid_r = pl.cdiv(r0, tile_r)

    kernel = _make_crps_kernel(
        E, tile_r, chunk,
        inv_be=1.0 / (B * E),
        neg_inv_bee=-1.0 / (B * E * E),
        sort_pairs=_term2_sort_pairs(E),
    )

    out_pad = pl.pallas_call(
        kernel,
        out_shape=jax.ShapeDtypeStruct((r0, _LANES), jnp.float32),
        grid_spec=pltpu.PrefetchScalarGridSpec(
            num_scalar_prefetch=0,
            # spatial tiles (parallel, megacore-shardable) x batch (reduction, last)
            grid=(grid_r, B),
            in_specs=[
                pl.BlockSpec((None, E, tile_r, _LANES), lambda r, b: (b, 0, r, 0)),
                pl.BlockSpec((None, 1, tile_r, _LANES), lambda r, b: (b, 0, r, 0)),
            ],
            out_specs=pl.BlockSpec((tile_r, _LANES), lambda r, b: (r, 0)),
        ),
        compiler_params=pltpu.CompilerParams(
            dimension_semantics=("parallel", "arbitrary"),
            vmem_limit_bytes=int(max(32 * 1024 * 1024, vmem_cap // 2)),
        ),
    )(fore_f, obs_f)

    return out_pad.reshape(-1)[:S].reshape(W, H)


# ---------------------------------------------------------------------------
# Reference + tests
# ---------------------------------------------------------------------------
def _reference(fore, obs):
    f = jnp.transpose(fore.astype(jnp.float32), (0, 2, 3, 1))   # (B, W, H, E)
    o = obs.astype(jnp.float32)[:, 0][..., None]                # (B, W, H, 1)
    term1 = jnp.mean(jnp.abs(f - o), axis=-1)                   # (B, W, H)
    diff = f[..., :, None] - f[..., None, :]                    # (B, W, H, E, E)
    term2 = jnp.mean(jnp.abs(diff), axis=(-2, -1))              # (B, W, H)
    return jnp.mean(term1 - 0.5 * term2, axis=0)                # (W, H)


def _run_case(key, B, E, W, H):
    kf, ko = jax.random.split(key)
    fore = jax.random.normal(kf, (B, E, W, H), dtype=jnp.float32)
    obs = jax.random.normal(ko, (B, 1, W, H), dtype=jnp.float32)
    out = jax.block_until_ready(crps_loss_batch_add_first(fore, obs))
    ref = jax.block_until_ready(_reference(fore, obs))
    np.testing.assert_allclose(np.asarray(out), np.asarray(ref), rtol=1e-5, atol=1e-5)


if __name__ == "__main__":
    keys = jax.random.split(jax.random.PRNGKey(0), 4)
    # Primary small case: pair-loop term2, single chunk, no padding.
    _run_case(keys[0], B=2, E=4, W=16, H=16)
    # Exercises the pad-to-128 path and the sorted-ensemble term2 path (E >= 8).
    _run_case(keys[1], B=3, E=9, W=12, H=12)
    # Exercises multi-tile grid, in-kernel chunk fori_loop, ragged trailing tile.
    _run_case(keys[2], B=2, E=4, W=144, H=144)
    # Exercises the remainder chunk and a larger sorted-ensemble network.
    _run_case(keys[3], B=2, E=20, W=32, H=40)
    print("KERNEL_OK")
</pallas_src>

<mosaic_0001>
module attributes {stable_mosaic.version = 11 : i64} {
  func.func @kernel(%arg0: i32, %arg1: i32, %arg2: memref<1x4x2x128xf32, #tpu.memory_space<vmem>>, %arg3: memref<1x1x2x128xf32, #tpu.memory_space<vmem>>, %arg4: memref<2x128xf32, #tpu.memory_space<vmem>>) attributes {dimension_semantics = [#tpu.dimension_semantics<parallel>, #tpu.dimension_semantics<arbitrary>], iteration_bounds = array<i64: 1, 2>, scalar_prefetch = 0 : i64, scratch_operands = 0 : i64, tpu.core_type = #tpu.core_type<tc>, window_params = [{transform_indices = @transform_0, window_bounds = array<i64: 1, 4, 2, 128>}, {transform_indices = @transform_1, window_bounds = array<i64: 1, 1, 2, 128>}, {transform_indices = @transform_2, window_bounds = array<i64: 2, 128>}]} {
    %c0_i32 = arith.constant 0 : i32
    %0 = arith.cmpi eq, %arg1, %c0_i32 : i32
    %c0 = arith.constant 0 : index
    %c0_0 = arith.constant 0 : index
    %c0_1 = arith.constant 0 : index
    %c0_2 = arith.constant 0 : index
    %1 = vector.load %arg3[%c0, %c0_0, %c0_1, %c0_2] : memref<1x1x2x128xf32, #tpu.memory_space<vmem>>, vector<1x1x2x128xf32>
    %2 = vector.shape_cast %1 : vector<1x1x2x128xf32> to vector<2x128xf32>
    %c0_3 = arith.constant 0 : index
    %c0_4 = arith.constant 0 : index
    %c0_5 = arith.constant 0 : index
    %c0_6 = arith.constant 0 : index
    %3 = vector.load %arg2[%c0_3, %c0_4, %c0_5, %c0_6] : memref<1x4x2x128xf32, #tpu.memory_space<vmem>>, vector<1x1x2x128xf32>
    %4 = vector.shape_cast %3 : vector<1x1x2x128xf32> to vector<2x128xf32>
    %c0_7 = arith.constant 0 : index
    %c1 = arith.constant 1 : index
    %c0_8 = arith.constant 0 : index
    %c0_9 = arith.constant 0 : index
    %5 = vector.load %arg2[%c0_7, %c1, %c0_8, %c0_9] : memref<1x4x2x128xf32, #tpu.memory_space<vmem>>, vector<1x1x2x128xf32>
    %6 = vector.shape_cast %5 : vector<1x1x2x128xf32> to vector<2x128xf32>
    %c0_10 = arith.constant 0 : index
    %c2 = arith.constant 2 : index
    %c0_11 = arith.constant 0 : index
    %c0_12 = arith.constant 0 : index
    %7 = vector.load %arg2[%c0_10, %c2, %c0_11, %c0_12] : memref<1x4x2x128xf32, #tpu.memory_space<vmem>>, vector<1x1x2x128xf32>
    %8 = vector.shape_cast %7 : vector<1x1x2x128xf32> to vector<2x128xf32>
    %c0_13 = arith.constant 0 : index
    %c3 = arith.constant 3 : index
    %c0_14 = arith.constant 0 : index
    %c0_15 = arith.constant 0 : index
    %9 = vector.load %arg2[%c0_13, %c3, %c0_14, %c0_15] : memref<1x4x2x128xf32, #tpu.memory_space<vmem>>, vector<1x1x2x128xf32>
    %10 = vector.shape_cast %9 : vector<1x1x2x128xf32> to vector<2x128xf32>
    %11 = arith.subf %4, %2 : vector<2x128xf32>
    %12 = math.absf %11 : vector<2x128xf32>
    %13 = arith.subf %6, %2 : vector<2x128xf32>
    %14 = math.absf %13 : vector<2x128xf32>
    %15 = arith.subf %8, %2 : vector<2x128xf32>
    %16 = math.absf %15 : vector<2x128xf32>
    %17 = arith.subf %10, %2 : vector<2x128xf32>
    %18 = math.absf %17 : vector<2x128xf32>
    %19 = arith.addf %12, %14 : vector<2x128xf32>
    %20 = arith.addf %16, %18 : vector<2x128xf32>
    %21 = arith.addf %19, %20 : vector<2x128xf32>
    %22 = arith.subf %4, %6 : vector<2x128xf32>
    %23 = math.absf %22 : vector<2x128xf32>
    %24 = arith.subf %4, %8 : vector<2x128xf32>
    %25 = math.absf %24 : vector<2x128xf32>
    %26 = arith.subf %4, %10 : vector<2x128xf32>
    %27 = math.absf %26 : vector<2x128xf32>
    %28 = arith.subf %6, %8 : vector<2x128xf32>
    %29 = math.absf %28 : vector<2x128xf32>
    %30 = arith.subf %6, %10 : vector<2x128xf32>
    %31 = math.absf %30 : vector<2x128xf32>
    %32 = arith.addf %23, %31 : vector<2x128xf32>
    %33 = arith.subf %8, %10 : vector<2x128xf32>
    %34 = math.absf %33 : vector<2x128xf32>
    %35 = arith.addf %25, %34 : vector<2x128xf32>
    %36 = arith.addf %32, %35 : vector<2x128xf32>
    %37 = arith.addf %27, %29 : vector<2x128xf32>
    %38 = arith.addf %36, %37 : vector<2x128xf32>
    %cst = arith.constant 1.250000e-01 : f32
    %39 = vector.broadcast %cst : f32 to vector<2x128xf32>
    %40 = arith.mulf %39, %21 : vector<2x128xf32>
    %cst_16 = arith.constant -3.125000e-02 : f32
    %41 = vector.broadcast %cst_16 : f32 to vector<2x128xf32>
    %42 = arith.mulf %41, %38 : vector<2x128xf32>
    %43 = arith.addf %40, %42 : vector<2x128xf32>
    %44 = arith.extui %0 : i1 to i32
    %c0_i32_17 = arith.constant 0 : i32
    %45 = arith.cmpi ne, %44, %c0_i32_17 : i32
    scf.if %45 {
      %c0_19 = arith.constant 0 : index
      %c0_20 = arith.constant 0 : index
      %49 = vector.load %arg4[%c0_19, %c0_20] : memref<2x128xf32, #tpu.memory_space<vmem>>, vector<2x128xf32>
      tpu.vector_store %arg4[%c0_19, %c0_20], %43 {strides = array<i32>} : memref<2x128xf32, #tpu.memory_space<vmem>>, vector<2x128xf32>,
    } else {
    }
    %true = arith.constant true
    %46 = arith.xori %0, %true : i1
    %47 = arith.extui %46 : i1 to i32
    %c0_i32_18 = arith.constant 0 : i32
    %48 = arith.cmpi ne, %47, %c0_i32_18 : i32
    scf.if %48 {
      %c0_19 = arith.constant 0 : index
      %c0_20 = arith.constant 0 : index
      %49 = vector.load %arg4[%c0_19, %c0_20] : memref<2x128xf32, #tpu.memory_space<vmem>>, vector<2x128xf32>
      %50 = arith.addf %49, %43 : vector<2x128xf32>
      %c0_21 = arith.constant 0 : index
      %c0_22 = arith.constant 0 : index
      %51 = vector.load %arg4[%c0_21, %c0_22] : memref<2x128xf32, #tpu.memory_space<vmem>>, vector<2x128xf32>
      tpu.vector_store %arg4[%c0_21, %c0_22], %50 {strides = array<i32>} : memref<2x128xf32, #tpu.memory_space<vmem>>, vector<2x128xf32>,
    } else {
    }
    return
  }
  func.func @transform_0(%arg0: i32, %arg1: i32) -> (i32, i32, i32, i32) {
    %c0_i32 = arith.constant 0 : i32
    %c0_i32_0 = arith.constant 0 : i32
    %c0_i32_1 = arith.constant 0 : i32
    return %arg1, %c0_i32, %arg0, %c0_i32_0 : i32, i32, i32, i32
  }
  func.func @transform_1(%arg0: i32, %arg1: i32) -> (i32, i32, i32, i32) {
    %c0_i32 = arith.constant 0 : i32
    %c0_i32_0 = arith.constant 0 : i32
    %c0_i32_1 = arith.constant 0 : i32
    return %arg1, %c0_i32, %arg0, %c0_i32_0 : i32, i32, i32, i32
  }
  func.func @transform_2(%arg0: i32, %arg1: i32) -> (i32, i32) {
    %c0_i32 = arith.constant 0 : i32
    %c0_i32_0 = arith.constant 0 : i32
    return %arg0, %c0_i32 : i32, i32
  }
}

</mosaic_0001>

<llo_original>
// kernel: crps_loss_batch_add_first.1
$region0: #{crps_loss_batch_add_first.1}
  #allocation0 [shape = 'u32[]', space=smem, size = 0x4, offset = 0x4, fixed_abs, tag = 'smem constant byte address 0x4 - core index']
  #allocation1 [shape = 'u32[72,128]{1,0:T(1,128)}', space=vmem, size = 0x9000, scoped, tag = 'internal scratch']
  %s0 = inlined_call_operand.vmem [shape: f32[2,4,2,128], index: 0, kind: input, shape index: {}]
  %s1 = inlined_call_operand.vmem [shape: f32[2,1,2,128], index: 1, kind: input, shape index: {}]
  %s2 = inlined_call_operand.vmem [shape: f32[2,128], index: 2, kind: output, shape index: {}]
  %s3 = sld [smem:[#allocation0]]
  $region49: #{crps_loss_batch_add_first.1} parent=0
    _
  %s5 = ssub.s32 1, %s3
  %s6 = scalar_select 0, %s5, %s3
  loop: start=0, step=1, limit=4
  $region2: #{crps_loss_batch_add_first.1} parent=0 // loop_pre_header
    _
  $region3: #{crps_loss_batch_add_first.1} parent=0 // loop_header
    %s8 = sphi 0, %s12
    %p9 = scmp.ge.s32.totalorder %s8, 4
    %s15 = sphi 0, %s27
    %s16 = sphi 0, %s23
    %s17 = sphi 0, %s15
    %s18 = sphi 0, %s16
    %s19 = sphi 0, %s17
    %s20 = sphi 0, %s18
    %s32 = sphi 0, %s34
    %s35 = sphi 0, %s32
    %s36 = sphi 0, %s35
    %s52 = sphi 0, %s36
    %s60 = sphi 0, %s62
    %s63 = sphi 0, %s60
    %s64 = sphi 0, %s63
    %s80 = sphi 0, %s64
    %s86 = sphi 0, %s88
    %s89 = sphi 0, %s86
    %s90 = sphi 0, %s89
    %s106 = sphi 0, %s90
  $region4: #{crps_loss_batch_add_first.1} parent=0 // loop_header_branch
    %11 = sbr.rel (%p9) target = $region8
  $region5: #{crps_loss_batch_add_first.1} parent=0 // loop_body
    %s13 = ssub.s32 %s8, 1
    %s14 = ssub.s32 %s8, 2
    %s21 = sadd.s32 1, %s16
    %p22 = scmp.ge.s32.totalorder %s21, 2
    %s23 = scalar_select %p22, 0, %s21
    %s24 = sadd.s32 1, %s15
    %s25 = scalar_select %p22, %s24, %s15
    %p26 = scmp.ge.s32.totalorder %s25, 1
    %s27 = scalar_select %p26, 0, %s25
    %s28 = ssub.s32 %s16, %s23
    %s29 = ssub.s32 %s15, %s27
    %s30 = sor.u32 %s28, %s29
    %p31 = scmp.eq.s32.totalorder %s30, 0
    %s33 = sadd.s32 %s32, 1
    %s34 = scalar_select %p31, %s32, %s33
    %p37 = pneg %p31
    %p38 = scmp.eq.s32.totalorder %s8, 1
    %p39 = por %p37, %p38
    %p40 = scmp.ne.s32.totalorder %s32, %s35
    %p41 = scmp.eq.s32.totalorder %s8, 0
    %p42 = por %p40, %p41
    %p43 = scmp.ne.s32.totalorder %s32, %s35
    %p44 = scmp.eq.s32.totalorder %s13, 1
    %p45 = por %p43, %p44
    %p46 = scmp.ne.s32.totalorder %s35, %s36
    %p47 = scmp.eq.s32.totalorder %s13, 0
    %p48 = por %p46, %p47
    %p49 = scmp.ne.s32.totalorder %s35, %s36
    %p50 = scmp.eq.s32.totalorder %s14, 1
    %p51 = por %p49, %p50
    %p53 = scmp.ne.s32.totalorder %s36, %s52
    %p54 = scmp.eq.s32.totalorder %s14, 0
    %p55 = por %p53, %p54
    %s56 = ssub.s32 %s16, %s23
    %s57 = ssub.s32 %s15, %s27
    %s58 = sor.u32 %s56, %s57
    %p59 = scmp.eq.s32.totalorder %s58, 0
    %s61 = sadd.s32 %s60, 1
    %s62 = scalar_select %p59, %s60, %s61
    %p65 = pneg %p59
    %p66 = scmp.eq.s32.totalorder %s8, 1
    %p67 = por %p65, %p66
    %p68 = scmp.ne.s32.totalorder %s60, %s63
    %p69 = scmp.eq.s32.totalorder %s8, 0
    %p70 = por %p68, %p69
    %p71 = scmp.ne.s32.totalorder %s60, %s63
    %p72 = scmp.eq.s32.totalorder %s13, 1
    %p73 = por %p71, %p72
    %p74 = scmp.ne.s32.totalorder %s63, %s64
    %p75 = scmp.eq.s32.totalorder %s13, 0
    %p76 = por %p74, %p75
    %p77 = scmp.ne.s32.totalorder %s63, %s64
    %p78 = scmp.eq.s32.totalorder %s14, 1
    %p79 = por %p77, %p78
    %p81 = scmp.ne.s32.totalorder %s64, %s80
    %p82 = scmp.eq.s32.totalorder %s14, 0
    %p83 = por %p81, %p82
    %s84 = ssub.s32 %s15, %s27
    %p85 = scmp.eq.s32.totalorder %s84, 0
    %s87 = sadd.s32 %s86, 1
    %s88 = scalar_select %p85, %s86, %s87
    %p91 = pneg %p85
    %p92 = scmp.eq.s32.totalorder %s8, 1
    %p93 = por %p91, %p92
    %p94 = scmp.ne.s32.totalorder %s86, %s89
    %p95 = scmp.eq.s32.totalorder %s8, 0
    %p96 = por %p94, %p95
    %p97 = scmp.ne.s32.totalorder %s86, %s89
    %p98 = scmp.eq.s32.totalorder %s13, 1
    %p99 = por %p97, %p98
    %p100 = scmp.ne.s32.totalorder %s89, %s90
    %p101 = scmp.eq.s32.totalorder %s13, 0
    %p102 = por %p100, %p101
    %p103 = scmp.ne.s32.totalorder %s89, %s90
    %p104 = scmp.eq.s32.totalorder %s14, 1
    %p105 = por %p103, %p104
    %p107 = scmp.ne.s32.totalorder %s90, %s106
    %p108 = scmp.eq.s32.totalorder %s14, 0
    %p109 = por %p107, %p108
    %p110 = scmp.le.s32.totalorder 1, %s8
    %p111 = scmp.lt.s32.totalorder %s8, 3
    %p112 = pnand %p110, %p111
    %p113 = pneg %p112
    // Predicated region
    $region9: #{crps_loss_batch_add_first.1} parent=5 // pred_check
      _
    $region10: #{crps_loss_batch_add_first.1} parent=5 // pred_check_branch
      %115 = sbr.rel (%p112) target = $region12
    $region11: #{crps_loss_batch_add_first.1} parent=5 // pred_region
      %s116 = ssub.s32 %s8, 1
    $region12: #{crps_loss_batch_add_first.1} parent=5 // pred_fallthru
      _
    %p117 = scmp.lt.s32.totalorder %s8, 2
    // Predicated region
    $region13: #{crps_loss_batch_add_first.1} parent=5 // pred_check
      %p118 = pneg %p117
    $region14: #{crps_loss_batch_add_first.1} parent=5 // pred_check_branch
      %120 = sbr.rel (%p118) target = $region16
    $region15: #{crps_loss_batch_add_first.1} parent=5 // pred_region
      // Predicated region
      $region17: #{crps_loss_batch_add_first.1} parent=15 // pred_check
        %p121 = pneg %p42
      $region18: #{crps_loss_batch_add_first.1} parent=15 // pred_check_branch
        %123 = sbr.rel (%p121) target = $region20
      $region19: #{crps_loss_batch_add_first.1} parent=15 // pred_region
        %p124 = scmp.lt.s32.totalorder %s16, 1
        %s125 = scalar_select %p124, %s16, 1
        %p126 = scmp.lt.s32.totalorder %s15, 0
        %s127 = scalar_select %p126, %s15, 0
        %s128 = smul.addr %s125, 4
        %s129 = sadd.s32 %s127, %s128
        %s130 = smul.addr %s129, 2
        %s131 = scalar_lea.vmem %s0, %s130
      $region20: #{crps_loss_batch_add_first.1} parent=15 // pred_fallthru
        _
      // Predicated region
      $region21: #{crps_loss_batch_add_first.1} parent=15 // pred_check
        %p132 = pneg %p70
      $region22: #{crps_loss_batch_add_first.1} parent=15 // pred_check_branch
        %134 = sbr.rel (%p132) target = $region24
      $region23: #{crps_loss_batch_add_first.1} parent=15 // pred_region
        %p135 = scmp.lt.s32.totalorder %s16, 1
        %s136 = scalar_select %p135, %s16, 1
        %p137 = scmp.lt.s32.totalorder %s15, 0
        %s138 = scalar_select %p137, %s15, 0
        %s139 = sadd.s32 %s138, %s136
        %s140 = smul.addr %s139, 2
        %s141 = scalar_lea.vmem %s1, %s140
      $region24: #{crps_loss_batch_add_first.1} parent=15 // pred_fallthru
        _
    $region16: #{crps_loss_batch_add_first.1} parent=5 // pred_fallthru
      _
    %p142 = scmp.le.s32.totalorder 1, %s8
    %p143 = scmp.lt.s32.totalorder %s8, 3
    %p144 = pnand %p142, %p143
    %p145 = pneg %p144
    // Predicated region
    $region25: #{crps_loss_batch_add_first.1} parent=5 // pred_check
      _
    $region26: #{crps_loss_batch_add_first.1} parent=5 // pred_check_branch
      %147 = sbr.rel (%p144) target = $region28
    $region27: #{crps_loss_batch_add_first.1} parent=5 // pred_region
      %s148 = ssub.s32 %s8, 1
      %p149 = scmp.lt.s32.totalorder %s18, 1
      %s150 = scalar_select %p149, %s18, 1
      %p151 = scmp.lt.s32.totalorder %s17, 0
      %s152 = scalar_select %p151, %s17, 0
      %s153 = smul.addr %s150, 4
      %s154 = sadd.s32 %s152, %s153
      %s155 = smul.addr %s154, 2
      %s156 = scalar_lea.vmem %s0, %s155
      %p157 = pneg %p48
      %p158 = pneg %p45
      %p159 = scmp.lt.s32.totalorder %s18, 1
      %s160 = scalar_select %p159, %s18, 1
      %p161 = scmp.lt.s32.totalorder %s17, 0
      %s162 = scalar_select %p161, %s17, 0
      %s163 = sadd.s32 %s162, %s160
      %s164 = smul.addr %s163, 2
      %s165 = scalar_lea.vmem %s1, %s164
      %p166 = pneg %p76
      %p167 = pneg %p73
      %p168 = pneg %p102
      %p169 = pneg %p99
      %p170 = scmp.lt.s32.totalorder %s17, 0
      %s171 = scalar_select %p170, %s17, 0
      %s172 = smul.addr %s171, 2
      %s173 = scalar_lea.vmem %s2, %s172
      %p174 = scmp.lt.s32.totalorder %s18, 1
      %s175 = scalar_select %p174, %s18, 1
      %p176 = scmp.lt.s32.totalorder %s17, 0
      %s177 = scalar_select %p176, %s17, 0
      %s178 = smul.addr %s175, 4
      %s179 = sadd.s32 %s177, %s178
      %s180 = smul.addr %s179, 2
      %s181 = scalar_lea.vmem %s0, %s180
      %p182 = scmp.lt.s32.totalorder %s18, 1
      %s183 = scalar_select %p182, %s18, 1
      %p184 = scmp.lt.s32.totalorder %s17, 0
      %s185 = scalar_select %p184, %s17, 0
      %s186 = sadd.s32 %s185, %s183
      %s187 = smul.addr %s186, 2
      %s188 = scalar_lea.vmem %s1, %s187
      %p189 = scmp.lt.s32.totalorder %s17, 0
      %s190 = scalar_select %p189, %s17, 0
      %s191 = smul.addr %s190, 2
      %s192 = scalar_lea.vmem %s2, %s191
      %p193 = scmp.eq.s32.totalorder %s18, 0
      %v194 = vld [vmem:[%s188] sm:$0x3]
      %v195 = vld [vmem:[%s181] sm:$0x3]
      %s196 = scalar_lea.vmem %s181, 2
      %v197 = vld [vmem:[%s196] sm:$0x3]
      %s198 = scalar_lea.vmem %s181, 4
      %v199 = vld [vmem:[%s198] sm:$0x3]
      %s200 = scalar_lea.vmem %s181, 6
      %v201 = vld [vmem:[%s200] sm:$0x3]
      %v202 = vsub.f32 %v195, %v194
      %v203 = vand.u32 2147483647, %v202
      %v204 = vsub.f32 %v197, %v194
      %v205 = vand.u32 2147483647, %v204
      %v206 = vsub.f32 %v199, %v194
      %v207 = vand.u32 2147483647, %v206
      %v208 = vsub.f32 %v201, %v194
      %v209 = vand.u32 2147483647, %v208
      %v210 = vadd.f32 %v203, %v205
      %v211 = vadd.f32 %v207, %v209
      %v212 = vadd.f32 %v210, %v211
      %v213 = vsub.f32 %v195, %v197
      %v214 = vand.u32 2147483647, %v213
      %v215 = vsub.f32 %v195, %v199
      %v216 = vand.u32 2147483647, %v215
      %v217 = vsub.f32 %v195, %v201
      %v218 = vand.u32 2147483647, %v217
      %v219 = vsub.f32 %v197, %v199
      %v220 = vand.u32 2147483647, %v219
      %v221 = vsub.f32 %v197, %v201
      %v222 = vand.u32 2147483647, %v221
      %v223 = vadd.f32 %v214, %v222
      %v224 = vsub.f32 %v199, %v201
      %v225 = vand.u32 2147483647, %v224
      %v226 = vadd.f32 %v216, %v225
      %v227 = vadd.f32 %v223, %v226
      %v228 = vadd.f32 %v218, %v220
      %v229 = vadd.f32 %v227, %v228
      %v230 = vmul.f32 %v212, 0.125
      %v231 = vmul.f32 %v229, -0.03125
      %v232 = vadd.f32 %v230, %v231
      // Predicated region
      $region29: #{crps_loss_batch_add_first.1} parent=27 // pred_check
        %p233 = pneg %p193
      $region30: #{crps_loss_batch_add_first.1} parent=27 // pred_check_branch
        %235 = sbr.rel (%p233) target = $region32
      $region31: #{crps_loss_batch_add_first.1} parent=27 // pred_region
        %236 = vst [vmem:[%s192] sm:$0x3] %v232
      $region32: #{crps_loss_batch_add_first.1} parent=27 // pred_fallthru
        _
      %p237 = scmp.ne.s32.totalorder %s18, 0
      // Predicated region
      $region33: #{crps_loss_batch_add_first.1} parent=27 // pred_check
        %p238 = pneg %p237
      $region34: #{crps_loss_batch_add_first.1} parent=27 // pred_check_branch
        %240 = sbr.rel (%p238) target = $region36
      $region35: #{crps_loss_batch_add_first.1} parent=27 // pred_region
        %v241 = vld [vmem:[%s192] sm:$0x3]
        %v242 = vadd.f32 %v241, %v232
        %243 = vst [vmem:[%s192] sm:$0x3] %v242
      $region36: #{crps_loss_batch_add_first.1} parent=27 // pred_fallthru
        _
      %p244 = scmp.lt.s32.totalorder %s17, 0
      %s245 = scalar_select %p244, %s17, 0
      %s246 = smul.addr %s245, 2
      %s247 = scalar_lea.vmem %s2, %s246
      // Predicated region
      $region37: #{crps_loss_batch_add_first.1} parent=27 // pred_check
        %p248 = pneg %p99
      $region38: #{crps_loss_batch_add_first.1} parent=27 // pred_check_branch
        %250 = sbr.rel (%p248) target = $region40
      $region39: #{crps_loss_batch_add_first.1} parent=27 // pred_region
        _
      $region40: #{crps_loss_batch_add_first.1} parent=27 // pred_fallthru
        _
      // Predicated region
      $region41: #{crps_loss_batch_add_first.1} parent=27 // pred_check
        %p251 = pneg %p99
      $region42: #{crps_loss_batch_add_first.1} parent=27 // pred_check_branch
        %253 = sbr.rel (%p251) target = $region44
      $region43: #{crps_loss_batch_add_first.1} parent=27 // pred_region
        %p254 = scmp.lt.s32.totalorder %s17, 0
        %s255 = scalar_select %p254, %s17, 0
        %s256 = smul.addr %s255, 2
        %s257 = scalar_lea.vmem %s2, %s256
      $region44: #{crps_loss_batch_add_first.1} parent=27 // pred_fallthru
        _
    $region28: #{crps_loss_batch_add_first.1} parent=5 // pred_fallthru
      _
    %p258 = scmp.le.s32.totalorder 2, %s8
    // Predicated region
    $region45: #{crps_loss_batch_add_first.1} parent=5 // pred_check
      %p259 = pneg %p258
    $region46: #{crps_loss_batch_add_first.1} parent=5 // pred_check_branch
      %261 = sbr.rel (%p259) target = $region48
    $region47: #{crps_loss_batch_add_first.1} parent=5 // pred_region
      %s262 = ssub.s32 %s8, 2
    $region48: #{crps_loss_batch_add_first.1} parent=5 // pred_fallthru
      _
  $region6: #{crps_loss_batch_add_first.1} parent=0 // loop_footer
    %s12 = sadd.s32 1, %s8
  $region7: #{crps_loss_batch_add_first.1} parent=0 // loop_footer_branch
    %7 = sbr.rel target = $region3
  $region8: #{crps_loss_batch_add_first.1} parent=0 // loop_exit
    _

</llo_original>
